<compile_context>
chip_gen: v6e
topology: v6e:2x2x1
jax: 0.10.0
libtpu: 0.0.40
codegen_flags: <defaults>
</compile_context>

<pallas_src>
import jax
import jax.numpy as jnp
from jax.experimental import pallas as pl
from jax.experimental.pallas import tpu as pltpu


# ---------------------------------------------------------------------------
# Kernels
# ---------------------------------------------------------------------------
def _lin_kernel_fused_k(x_ref, w_ref, b_ref, o_ref):
    """K fits in a single VMEM tile: one MXU matmul + bias add, direct store."""
    o_ref[...] = (
        jnp.dot(x_ref[...], w_ref[...], preferred_element_type=jnp.float32)
        + b_ref[...].astype(jnp.float32)
    ).astype(o_ref.dtype)


def _lin_kernel_tiled_k(x_ref, w_ref, b_ref, o_ref, acc_ref):
    """K tiled along grid axis 2: f32 accumulator scratch; bias folded into the
    accumulator init so the last-k step is just a cast + store."""
    k = pl.program_id(2)

    @pl.when(k == 0)
    def _():
        # Fold bias into the init instead of zeros + epilogue add.
        acc_ref[...] = jnp.broadcast_to(
            b_ref[...].astype(jnp.float32), acc_ref.shape
        )

    acc_ref[...] += jnp.dot(
        x_ref[...], w_ref[...], preferred_element_type=jnp.float32
    )

    @pl.when(k == pl.num_programs(2) - 1)
    def _():
        o_ref[...] = acc_ref[...].astype(o_ref.dtype)


# ---------------------------------------------------------------------------
# Tiling helpers
# ---------------------------------------------------------------------------
def _round_up(x, m):
    return ((x + m - 1) // m) * m


def _chip_caps():
    """Per-generation tile caps keyed on VMEM capacity.

    64 MiB physical VMEM -> v7x-class (2 TensorCores): smaller K tile, 48 MiB
    scoped limit, and make sure the output grid has >= 2 parallel tiles.
    128 MiB -> v5e/v6e: larger K tile, 96 MiB scoped limit.
    """
    vmem_bytes = 64 << 20  # conservative fallback
    try:
        vmem_bytes = int(pltpu.get_tpu_info().vmem_capacity_bytes)
    except Exception:
        pass
    if vmem_bytes <= (64 << 20):
        return {"tm": 512, "tn": 512, "tk": 512,
                "vmem_limit": 48 << 20, "two_cores": True}
    return {"tm": 512, "tn": 512, "tk": 1024,
            "vmem_limit": 96 << 20, "two_cores": False}


def _pick_tile(dim, cap, align):
    """Return (tile, padded_dim).

    If the dim fits under the cap we use a full-extent block (no (8,128)
    alignment requirement, no padding). Otherwise the tile is the cap rounded
    to the lane/sublane alignment and the dim is padded to a tile multiple.
    """
    if dim <= cap:
        return dim, dim
    t = max(align, (cap // align) * align)
    return t, _round_up(dim, t)


# ---------------------------------------------------------------------------
# Forward wrapper
# ---------------------------------------------------------------------------
def lin_forward(x, w, b, *, tm=None, tn=None, tk=None):
    M, K = x.shape
    K2, N = w.shape
    assert K == K2 and b.shape == (N,)

    caps = _chip_caps()
    out_dtype = jnp.result_type(x.dtype, w.dtype, b.dtype)
    itemsize = jnp.dtype(out_dtype).itemsize

    # Tile selection (user overrides act as caps). Sublane align = 8, lane = 128.
    tm_, Mp = _pick_tile(M, caps["tm"] if tm is None else tm, 8)
    tn_, Np = _pick_tile(N, caps["tn"] if tn is None else tn, 128)
    tk_, Kp = _pick_tile(K, caps["tk"] if tk is None else tk, 128)

    # On 2-TC chips make sure there are at least 2 parallel output tiles so
    # both TensorCores get work (only possible when a split stays aligned).
    if caps["two_cores"] and (Mp // tm_) * (Np // tn_) < 2:
        if tn_ == Np and Np % 256 == 0:
            tn_ //= 2
        elif tm_ == Mp and Mp % 16 == 0:
            tm_ //= 2

    # Host-side zero padding to tile multiples (zeros in K contribute nothing;
    # padded M rows / N cols are sliced off below).
    xp = x if (Mp == M and Kp == K) else jnp.pad(x, ((0, Mp - M), (0, Kp - K)))
    wp = w if (Kp == K and Np == N) else jnp.pad(w, ((0, Kp - K), (0, Np - N)))
    bp = (b if Np == N else jnp.pad(b, (0, Np - N))).reshape(1, Np)

    cost = pl.CostEstimate(
        flops=2 * M * N * K,
        transcendentals=0,
        bytes_accessed=(M * K + K * N + M * N + N) * itemsize,
    )

    k_blocks = Kp // tk_
    if k_blocks == 1:
        # K fits in VMEM alongside the output tile: drop the K grid axis.
        grid = (Mp // tm_, Np // tn_)
        out_p = pl.pallas_call(
            _lin_kernel_fused_k,
            out_shape=jax.ShapeDtypeStruct((Mp, Np), out_dtype),
            grid_spec=pltpu.PrefetchScalarGridSpec(
                num_scalar_prefetch=0,
                grid=grid,
                in_specs=[
                    pl.BlockSpec((tm_, Kp), lambda i, j: (i, 0)),   # x tile
                    pl.BlockSpec((Kp, tn_), lambda i, j: (0, j)),   # w tile
                    pl.BlockSpec((1, tn_), lambda i, j: (0, j)),    # bias row
                ],
                out_specs=pl.BlockSpec((tm_, tn_), lambda i, j: (i, j)),
            ),
            compiler_params=pltpu.CompilerParams(
                dimension_semantics=("parallel", "parallel"),
                vmem_limit_bytes=caps["vmem_limit"],
            ),
            cost_estimate=cost,
        )(xp, wp, bp)
    else:
        grid = (Mp // tm_, Np // tn_, k_blocks)
        out_p = pl.pallas_call(
            _lin_kernel_tiled_k,
            out_shape=jax.ShapeDtypeStruct((Mp, Np), out_dtype),
            grid_spec=pltpu.PrefetchScalarGridSpec(
                num_scalar_prefetch=0,
                grid=grid,
                in_specs=[
                    pl.BlockSpec((tm_, tk_), lambda i, j, k: (i, k)),  # x tile
                    pl.BlockSpec((tk_, tn_), lambda i, j, k: (k, j)),  # w tile
                    pl.BlockSpec((1, tn_), lambda i, j, k: (0, j)),    # bias row
                ],
                out_specs=pl.BlockSpec((tm_, tn_), lambda i, j, k: (i, j)),
                scratch_shapes=[pltpu.VMEM((tm_, tn_), jnp.float32)],
            ),
            compiler_params=pltpu.CompilerParams(
                dimension_semantics=("parallel", "parallel", "arbitrary"),
                vmem_limit_bytes=caps["vmem_limit"],
            ),
            cost_estimate=cost,
        )(xp, wp, bp)

    if Mp != M or Np != N:
        out_p = out_p[:M, :N]
    return out_p


# ---------------------------------------------------------------------------
# Demo / self-test
# ---------------------------------------------------------------------------
if __name__ == "__main__":
    key = jax.random.PRNGKey(0)

    def make(mkn, key):
        M, K, N = mkn
        kx, kw, kb = jax.random.split(key, 3)
        x = jax.random.normal(kx, (M, K), dtype=jnp.float32)
        w = jax.random.normal(kw, (K, N), dtype=jnp.float32) * 0.1
        b = jax.random.normal(kb, (N,), dtype=jnp.float32) * 0.01
        return x, w, b

    k1, k2, k3 = jax.random.split(key, 3)

    # 1) Small Lin shape (batch=8, in=32, out=128): fused-K (2-D grid) path.
    x, w, b = make((8, 32, 128), k1)
    out = jax.block_until_ready(lin_forward(x, w, b))
    ref = x @ w + b
    assert out.shape == ref.shape
    assert jnp.allclose(out, ref, atol=1e-5, rtol=1e-5)

    # 2) Exercise the tiled-K accumulator path (grid 2x2x2) with tiny tiles.
    x, w, b = make((16, 256, 256), k2)
    out = jax.block_until_ready(lin_forward(x, w, b, tm=8, tn=128, tk=128))
    ref = x @ w + b
    assert jnp.allclose(out, ref, atol=1e-4, rtol=1e-5)

    # 3) Exercise padding for non-tile-aligned shapes.
    x, w, b = make((10, 200, 300), k3)
    out = jax.block_until_ready(lin_forward(x, w, b, tm=8, tn=128, tk=128))
    ref = x @ w + b
    assert out.shape == ref.shape
    assert jnp.allclose(out, ref, atol=1e-4, rtol=1e-5)

    # TODO(synk): backward pass (inp.g, w.g, b.g) not implemented; forward only.
    print("KERNEL_OK")
</pallas_src>

<mosaic_0001>
module attributes {stable_mosaic.version = 11 : i64} {
  func.func @_lin_kernel_fused_k(%arg0: i32, %arg1: i32, %arg2: memref<8x32xf32, #tpu.memory_space<vmem>>, %arg3: memref<32x128xf32, #tpu.memory_space<vmem>>, %arg4: memref<1x128xf32, #tpu.memory_space<vmem>>, %arg5: memref<8x128xf32, #tpu.memory_space<vmem>>) attributes {dimension_semantics = [#tpu.dimension_semantics<parallel>, #tpu.dimension_semantics<parallel>], iteration_bounds = array<i64: 1, 1>, scalar_prefetch = 0 : i64, scratch_operands = 0 : i64, tpu.core_type = #tpu.core_type<tc>, window_params = [{transform_indices = @transform_0, window_bounds = array<i64: 8, 32>}, {transform_indices = @transform_1, window_bounds = array<i64: 32, 128>}, {transform_indices = @transform_2, window_bounds = array<i64: 1, 128>}, {transform_indices = @transform_3, window_bounds = array<i64: 8, 128>}]} {
    %c0 = arith.constant 0 : index
    %c0_0 = arith.constant 0 : index
    %0 = vector.load %arg2[%c0, %c0_0] : memref<8x32xf32, #tpu.memory_space<vmem>>, vector<8x32xf32>
    %c0_1 = arith.constant 0 : index
    %c0_2 = arith.constant 0 : index
    %1 = vector.load %arg3[%c0_1, %c0_2] : memref<32x128xf32, #tpu.memory_space<vmem>>, vector<32x128xf32>
    %cst = arith.constant dense<0.000000e+00> : vector<8x128xf32>
    %2 = tpu.matmul %0, %1, %cst {dimension_numbers = #tpu.dot_dimension_numbers<[1], [0], [0], [1], [0, 0, 1, 1], [], []>} : vector<8x32xf32>, vector<32x128xf32>, vector<8x128xf32> -> vector<8x128xf32>
    %c0_3 = arith.constant 0 : index
    %c0_4 = arith.constant 0 : index
    %3 = vector.load %arg4[%c0_3, %c0_4] : memref<1x128xf32, #tpu.memory_space<vmem>>, vector<1x128xf32>
    %4 = vector.broadcast %3 : vector<1x128xf32> to vector<8x128xf32>
    %5 = arith.addf %2, %4 : vector<8x128xf32>
    %c0_5 = arith.constant 0 : index
    %c0_6 = arith.constant 0 : index
    %6 = vector.load %arg5[%c0_5, %c0_6] : memref<8x128xf32, #tpu.memory_space<vmem>>, vector<8x128xf32>
    tpu.vector_store %arg5[%c0_5, %c0_6], %5 {strides = array<i32>} : memref<8x128xf32, #tpu.memory_space<vmem>>, vector<8x128xf32>,
    return
  }
  func.func @transform_0(%arg0: i32, %arg1: i32) -> (i32, i32) {
    %c0_i32 = arith.constant 0 : i32
    %c0_i32_0 = arith.constant 0 : i32
    return %arg0, %c0_i32 : i32, i32
  }
  func.func @transform_1(%arg0: i32, %arg1: i32) -> (i32, i32) {
    %c0_i32 = arith.constant 0 : i32
    %c0_i32_0 = arith.constant 0 : i32
    return %c0_i32, %arg1 : i32, i32
  }
  func.func @transform_2(%arg0: i32, %arg1: i32) -> (i32, i32) {
    %c0_i32 = arith.constant 0 : i32
    %c0_i32_0 = arith.constant 0 : i32
    return %c0_i32, %arg1 : i32, i32
  }
  func.func @transform_3(%arg0: i32, %arg1: i32) -> (i32, i32) {
    %c0_i32 = arith.constant 0 : i32
    return %arg0, %arg1 : i32, i32
  }
}

</mosaic_0001>

<llo_original>
// kernel: tpu_custom_call.1
$region0: #{tpu_custom_call.1}
  #allocation0 [shape = 'u32[]', space=smem, size = 0x4, offset = 0x4, fixed_abs, tag = 'smem constant byte address 0x4 - core index']
  #allocation1 [shape = 'u32[144,128]{1,0:T(1,128)}', space=vmem, size = 0x12000, scoped, tag = 'internal scratch']
  %s0 = inlined_call_operand.hbm [shape: f32[8,32], index: 0, kind: input, shape index: {}]
  %s1 = inlined_call_operand.hbm [shape: f32[32,128], index: 1, kind: input, shape index: {}]
  %s2 = inlined_call_operand.vmem [shape: f32[1,128], index: 2, kind: input, shape index: {}]
  %s3 = inlined_call_operand.hbm [shape: f32[8,128], index: 3, kind: output, shape index: {}]
  %s4 = sld [smem:[#allocation0]]
  $region30: #{tpu_custom_call.1} parent=0
    _
  %s6 = ssub.s32 1, %s4
  %s7 = scalar_select 0, %s6, %s4
  $region1: #{tpu_custom_call.1} parent=0
    #allocation2 [shape = 'u8[4096]{0}', space=vmem, size = 0x1000, scoped, tag = 'input window, operand 0, single buffered']
    #allocation3 [shape = 's32[1]{0}', space=sflag, size = 0x4, scoped, tag = 'scoped memory for tpu_custom_call.1']
    #allocation4 [shape = 's32[1]{0}', space=sflag, size = 0x4, scoped, tag = 'scoped memory for tpu_custom_call.1']
    #allocation5 [shape = 'u8[16384]{0}', space=vmem, size = 0x4000, scoped, tag = 'input window, operand 1, single buffered']
    #allocation6 [shape = 's32[1]{0}', space=sflag, size = 0x4, scoped, tag = 'scoped memory for tpu_custom_call.1']
    #allocation7 [shape = 'u8[4096]{0}', space=vmem, size = 0x1000, scoped, tag = 'output window, operand 0, single buffered']
    %8 = vsyncpa [#allocation3], 0
    %9 = vsyncpa [#allocation6], 0
    %10 = vsyncpa [#allocation4], 0
    // Predicated region
    $region2: #{tpu_custom_call.1} parent=1 // pred_check
      _
    $region3: #{tpu_custom_call.1} parent=1 // pred_check_branch
      %12 = sbr.rel (0) target = $region5
    $region4: #{tpu_custom_call.1} parent=1 // pred_region
      %s14 = ssub.s32 128, 128
      %15 = vsyncadd [#allocation3], %s14
      %s17 = sshll.u32 [#allocation2], 4
      %s18 = int_to_ptr.vmem [resolvable:$true] %s17
      %20 = dma.hbm_to_vmem [thread:$0]  %s0, 128, %s18, [#allocation3]
    $region5: #{tpu_custom_call.1} parent=1 // pred_fallthru
      _
    // Predicated region
    $region6: #{tpu_custom_call.1} parent=1 // pred_check
      _
    $region7: #{tpu_custom_call.1} parent=1 // pred_check_branch
      %22 = sbr.rel (0) target = $region9
    $region8: #{tpu_custom_call.1} parent=1 // pred_region
      %s24 = ssub.s32 512, 512
      %25 = vsyncadd [#allocation6], %s24
      %s26 = sshll.u32 [#allocation5], 4
      %s27 = int_to_ptr.vmem [resolvable:$true] %s26
      %32 = dma.hbm_to_vmem [thread:$0]  %s1, 512, %s27, [#allocation6], 128, 128, 8
    $region9: #{tpu_custom_call.1} parent=1 // pred_fallthru
      _
    // Predicated region
    $region10: #{tpu_custom_call.1} parent=1 // pred_check
      _
    $region11: #{tpu_custom_call.1} parent=1 // pred_check_branch
      %34 = sbr.rel (0) target = $region13
    $region12: #{tpu_custom_call.1} parent=1 // pred_region
      _
    $region13: #{tpu_custom_call.1} parent=1 // pred_fallthru
      _
    // Predicated region
    $region14: #{tpu_custom_call.1} parent=1 // pred_check
      _
    $region15: #{tpu_custom_call.1} parent=1 // pred_check_branch
      %36 = sbr.rel (0) target = $region17
    $region16: #{tpu_custom_call.1} parent=1 // pred_region
      %37 = dma.done [#allocation3], 128
    $region17: #{tpu_custom_call.1} parent=1 // pred_fallthru
      _
    // Predicated region
    $region18: #{tpu_custom_call.1} parent=1 // pred_check
      _
    $region19: #{tpu_custom_call.1} parent=1 // pred_check_branch
      %39 = sbr.rel (0) target = $region21
    $region20: #{tpu_custom_call.1} parent=1 // pred_region
      %40 = dma.done [#allocation6], 512
    $region21: #{tpu_custom_call.1} parent=1 // pred_fallthru
      _
    %v41 = vld [vmem:[#allocation2] sm:$0xff]
    %v42 = vld [vmem:[#allocation5] sm:$0xff]
    %v43 = vld [vmem:[#allocation5 + $0x8] sm:$0xff]
    %v44 = vld [vmem:[#allocation5 + $0x10] sm:$0xff]
    %v45 = vld [vmem:[#allocation5 + $0x18] sm:$0xff]
    %v46 = vld [vmem:[%s2] sm:$0x1]
    %v48 = vlaneseq
    %v49 = vshrl.u32 %v48, 7
    %v50 = vsub.s32 0, %v49
    %v51 = vrot.slane %v46, %v50
    %vm53 = vcmask 261120
    %v55 = vsel %vm53, %v41, 0
    %57 = vmatprep.subr.mxu0 0.0
    %58 = vmatpush1.msra.mxu0 0.0
    %59 = vmatprep.subr.mxu0 0.0
    %60 = vmatpush1.msra.mxu0 0.0
    %61 = vmatprep.subr.mxu0 0.0
    %62 = vmatpush1.msra.mxu0 0.0
    %63 = vmatprep.subr.mxu0 0.0
    %64 = vmatpush1.msra.mxu0 0.0
    %65 = vmatprep.subr.mxu0 0.0
    %66 = vmatpush1.msra.mxu0 0.0
    %67 = vmatprep.subr.mxu0 0.0
    %68 = vmatpush1.msra.mxu0 0.0
    %69 = vmatprep.subr.mxu0 0.0
    %70 = vmatpush1.msra.mxu0 0.0
    %71 = vmatprep.subr.mxu0 0.0
    %72 = vmatpush1.msra.mxu0 0.0
    %73 = vmatprep.subr.mxu0 0.0
    %74 = vmatpush1.msra.mxu0 0.0
    %75 = vmatprep.subr.mxu0 0.0
    %76 = vmatpush1.msra.mxu0 0.0
    %77 = vmatprep.subr.mxu0 0.0
    %78 = vmatpush1.msra.mxu0 0.0
    %79 = vmatprep.subr.mxu0 0.0
    %80 = vmatpush1.msra.mxu0 0.0
    %81 = vmatprep.subr.mxu0 0.0
    %82 = vmatpush1.msra.mxu0 %v45
    %83 = vmatprep.subr.mxu0 0.0
    %84 = vmatpush1.msra.mxu0 %v44
    %85 = vmatprep.subr.mxu0 0.0
    %86 = vmatpush1.msra.mxu0 %v43
    %87 = vmatprep.subr.mxu0 0.0
    %88 = vmatpush1.msra.mxu0 %v42
    %89 = vmatprep.subr.mxu0 0.0
    %90 = vmatpush2.msra.mxu0 0.0
    %91 = vmatprep.subr.mxu0 0.0
    %92 = vmatpush2.msra.mxu0 0.0
    %93 = vmatprep.subr.mxu0 0.0
    %94 = vmatpush2.msra.mxu0 0.0
    %95 = vmatprep.subr.mxu0 0.0
    %96 = vmatpush2.msra.mxu0 0.0
    %97 = vmatprep.subr.mxu0 0.0
    %98 = vmatpush2.msra.mxu0 0.0
    %99 = vmatprep.subr.mxu0 0.0
    %100 = vmatpush2.msra.mxu0 0.0
    %101 = vmatprep.subr.mxu0 0.0
    %102 = vmatpush2.msra.mxu0 0.0
    %103 = vmatprep.subr.mxu0 0.0
    %104 = vmatpush2.msra.mxu0 0.0
    %105 = vmatprep.subr.mxu0 0.0
    %106 = vmatpush2.msra.mxu0 0.0
    %107 = vmatprep.subr.mxu0 0.0
    %108 = vmatpush2.msra.mxu0 0.0
    %109 = vmatprep.subr.mxu0 0.0
    %110 = vmatpush2.msra.mxu0 0.0
    %111 = vmatprep.subr.mxu0 0.0
    %112 = vmatpush2.msra.mxu0 0.0
    %113 = vmatprep.subr.mxu0 0.0
    %114 = vmatpush2.msra.mxu0 0.0
    %115 = vmatprep.subr.mxu0 0.0
    %116 = vmatpush2.msra.mxu0 0.0
    %117 = vmatprep.subr.mxu0 0.0
    %118 = vmatpush2.msra.mxu0 0.0
    %119 = vmatprep.subr.mxu0 0.0
    %120 = vmatpush2.msra.mxu0 0.0
    %121 = vmatprep.mubr.f32.mxu0 0.0
    %122 = vmatmul.mubr.f32.gmra.mxu0 %v55
    %v123 = vpop.f32.mrf.mxu0
    %v124 = vadd.f32 %v51, %v123
    %v125 = vpop.f32.mrf.mxu0
    %126 = vdwg.mxu0
    %127 = vst [vmem:[#allocation7] sm:$0xff] %v124
    // Predicated region
    $region22: #{tpu_custom_call.1} parent=1 // pred_check
      _
    $region23: #{tpu_custom_call.1} parent=1 // pred_check_branch
      %129 = sbr.rel (0) target = $region25
    $region24: #{tpu_custom_call.1} parent=1 // pred_region
      %s131 = ssub.s32 128, 128
      %132 = vsyncadd [#allocation4], %s131
      %s134 = sshll.u32 [#allocation7], 4
      %s135 = int_to_ptr.vmem [resolvable:$true] %s134
      %137 = dma.vmem_to_hbm [thread:$0]  %s135, 128, %s3, [#allocation4]
    $region25: #{tpu_custom_call.1} parent=1 // pred_fallthru
      _
    // Predicated region
    $region26: #{tpu_custom_call.1} parent=1 // pred_check
      _
    $region27: #{tpu_custom_call.1} parent=1 // pred_check_branch
      %139 = sbr.rel (0) target = $region29
    $region28: #{tpu_custom_call.1} parent=1 // pred_region
      %140 = dma.done [#allocation4], 128
    $region29: #{tpu_custom_call.1} parent=1 // pred_fallthru
      _
    %141 = vsyncpa [#allocation3], 1
    %142 = vsyncpa [#allocation6], 1
    %143 = vsyncpa [#allocation4], 1

</llo_original>
